<compile_context>
chip_gen: v7x
topology: tpu7x:2x2x1
jax: 0.10.0
libtpu: 0.0.40
codegen_flags: <defaults>
</compile_context>

<pallas_src>
import math

import jax
import jax.numpy as jnp
from jax.experimental import pallas as pl
from jax.experimental.pallas import tpu as pltpu


def _round_up(x, m):
    return ((x + m - 1) // m) * m


# ---------------------------------------------------------------------------
# Graph glue (plain JAX)
# ---------------------------------------------------------------------------
def _build_norm_adjacency_T(edge_index, num_nodes, padded_nodes):
    """A_norm^T, zero-padded to (padded_nodes, padded_nodes), f32.

    Matches the reference per-edge math exactly:
      deg = bincount(row); norm = deg^-1/2[row] * deg^-1/2[col];
      A[row, col] += norm   (duplicate edges accumulate, deg==0 -> 0 norm).
    """
    row, col = edge_index[0], edge_index[1]
    deg = jnp.bincount(row, length=num_nodes).astype(jnp.float32)
    deg_inv_sqrt = jnp.where(deg > 0, deg ** -0.5, 0.0)  # inf -> 0
    norm = deg_inv_sqrt[row] * deg_inv_sqrt[col]
    at = jnp.zeros((padded_nodes, padded_nodes), dtype=jnp.float32)
    at = at.at[col, row].add(norm)  # A^T[c, r] = A[r, c]
    return at


def _nonzero_tile_schedule(at_f32, tile_n, tile_k):
    """Per output-strip j: count + list of k tile indices with a nonzero A^T tile.

    Padded entries repeat the last valid index so Pallas issues no extra DMA.
    Returns (tile_ids (n_j, kgrid) i32, counts (n_j,) i32, kgrid int).
    """
    n_pad = at_f32.shape[0]
    n_k, n_j = n_pad // tile_k, n_pad // tile_n
    nz = (at_f32.reshape(n_k, tile_k, n_j, tile_n) != 0).any(axis=(1, 3))  # (n_k, n_j)
    counts = nz.sum(axis=0).astype(jnp.int32)                              # (n_j,)
    # Sort k indices so nonzero tiles come first.
    order = jnp.argsort(jnp.where(nz, 0, 1).astype(jnp.int32), axis=0).astype(jnp.int32)
    last_valid = jnp.maximum(counts - 1, 0)[None, :]
    krange = jnp.arange(n_k, dtype=jnp.int32)[:, None]
    order = jnp.where(krange < counts[None, :], order,
                      jnp.take_along_axis(order, last_valid, axis=0))
    kgrid = max(int(jnp.max(counts)), 1)        # static grid extent (host sync, once)
    tile_ids = order.T[:, :kgrid]               # (n_j, kgrid)
    return tile_ids, counts, kgrid


# ---------------------------------------------------------------------------
# Pallas kernel: one propagation layer,  E^T_out = E^T + E^T @ A^T
# ---------------------------------------------------------------------------
def _layer_kernel(ti_ref, cnt_ref, et_res_ref, et_k_ref, at_ref, o_ref, o_bf16_ref):
    j = pl.program_id(0)
    k = pl.program_id(1)

    @pl.when(k == 0)
    def _init():
        # Fold the residual "+ E" into the resident f32 output/accumulator tile.
        o_ref[...] = et_res_ref[...]

    @pl.when(k < cnt_ref[j])
    def _accumulate():
        # bf16 x bf16 MXU matmul, f32 accumulation directly into the output tile.
        o_ref[...] += jnp.dot(
            et_k_ref[...], at_ref[...], preferred_element_type=jnp.float32
        )

    @pl.when(k == pl.num_programs(1) - 1)
    def _emit_bf16():
        # bf16 copy of the layer output feeds the next layer's contraction
        # operand — removes the wrapper-side cast pass over E every layer.
        o_bf16_ref[...] = o_ref[...].astype(jnp.bfloat16)


def _vmem_capacity_bytes():
    try:
        return int(pltpu.get_tpu_info().vmem_capacity_bytes)
    except Exception:
        return 64 * 1024 * 1024  # conservative: v7x physical per-TensorCore


def _vmem_limit_bytes(d, tile_n, tile_k):
    per_buf = (
        d * tile_n * 4        # residual E^T tile (f32)
        + d * tile_k * 2      # contraction E^T tile (bf16)
        + tile_k * tile_n * 2  # A^T tile (bf16)
        + d * tile_n * 4      # f32 output / accumulator tile
        + d * tile_n * 2      # bf16 output tile
    )
    need = 2 * per_buf  # double-buffered pipelining
    return int(min(max(2 * need, 32 * 1024 * 1024), _vmem_capacity_bytes()))


def lightgcn_layer(tile_ids, counts, at_bf16, et_f32, et_bf16, *, tile_n, tile_k, kgrid):
    """One layer: returns (E^T + E^T @ A^T) as (f32, bf16), shape (D, N_pad)."""
    d, n_pad = et_f32.shape
    assert n_pad % tile_n == 0 and n_pad % tile_k == 0
    n_j = n_pad // tile_n

    return pl.pallas_call(
        _layer_kernel,
        out_shape=(
            jax.ShapeDtypeStruct((d, n_pad), jnp.float32),
            jax.ShapeDtypeStruct((d, n_pad), jnp.bfloat16),
        ),
        grid_spec=pltpu.PrefetchScalarGridSpec(
            num_scalar_prefetch=2,            # tile_ids, counts -> SMEM
            grid=(n_j, kgrid),
            in_specs=[
                # residual E^T tile for output strip j (f32)
                pl.BlockSpec((d, tile_n), lambda j, k, ti, cnt: (0, j)),
                # contraction E^T tile, remapped through the nonzero-tile list (bf16)
                pl.BlockSpec((d, tile_k), lambda j, k, ti, cnt: (0, ti[j, k])),
                # A^T tile (ti[j,k], j): zero tiles are never fetched (bf16)
                pl.BlockSpec((tile_k, tile_n), lambda j, k, ti, cnt: (ti[j, k], j)),
            ],
            out_specs=(
                pl.BlockSpec((d, tile_n), lambda j, k, ti, cnt: (0, j)),
                pl.BlockSpec((d, tile_n), lambda j, k, ti, cnt: (0, j)),
            ),
        ),
        compiler_params=pltpu.CompilerParams(
            dimension_semantics=("parallel", "arbitrary"),
            vmem_limit_bytes=_vmem_limit_bytes(d, tile_n, tile_k),
        ),
    )(tile_ids, counts, et_f32, et_bf16, at_bf16)


# ---------------------------------------------------------------------------
# Forward pass
# ---------------------------------------------------------------------------
def lightgcn_forward(user_emb, item_emb, edge_index, n_layers=2,
                     tile_n=512, tile_k=512):
    num_users, d = user_emb.shape
    num_items = item_emb.shape[0]
    n = num_users + num_items

    # Clamp tiles for tiny graphs (keep 128-lane alignment); pad the node
    # count so both grid axes divide exactly.  Padded nodes have zero
    # adjacency and zero embedding, so they stay zero and are sliced off.
    n_lane = _round_up(n, 128)
    tile_n = _round_up(max(128, min(int(tile_n), n_lane)), 128)
    tile_k = _round_up(max(128, min(int(tile_k), n_lane)), 128)
    mult = math.lcm(tile_n, tile_k)
    n_pad = _round_up(n, mult)

    all_emb = jnp.concatenate([user_emb, item_emb], axis=0)  # (N, D) f32
    et = jnp.zeros((d, n_pad), jnp.float32).at[:, :n].set(all_emb.T)
    et_bf16 = et.astype(jnp.bfloat16)  # cast once; later layers get bf16 from the kernel

    # deg/norm are recomputed per layer in the reference, but edge_index is
    # fixed, so the normalized adjacency is identical every layer: build once.
    at = _build_norm_adjacency_T(edge_index, n, n_pad)
    at_bf16 = at.astype(jnp.bfloat16)

    # Tile-level block-skip schedule (also identical every layer).
    tile_ids, counts, kgrid = _nonzero_tile_schedule(at, tile_n, tile_k)

    for _ in range(n_layers):
        et, et_bf16 = lightgcn_layer(
            tile_ids, counts, at_bf16, et, et_bf16,
            tile_n=tile_n, tile_k=tile_k, kgrid=kgrid,
        )

    out = et[:, :n].T  # (N, D)
    return out[:num_users], out[num_users:]


# ---------------------------------------------------------------------------
# Pure-JAX replica of the PyTorch gather / scale / index_add loop (f32 exact)
# ---------------------------------------------------------------------------
def _reference_forward(user_emb, item_emb, edge_index, n_layers=2):
    n = user_emb.shape[0] + item_emb.shape[0]
    all_emb = jnp.concatenate([user_emb, item_emb], axis=0)
    row, col = edge_index[0], edge_index[1]
    for _ in range(n_layers):
        deg = jnp.bincount(row, length=n).astype(jnp.float32)
        deg_inv_sqrt = jnp.where(deg > 0, deg ** -0.5, 0.0)
        norm = deg_inv_sqrt[row] * deg_inv_sqrt[col]
        messages = all_emb[col] * norm[:, None]
        all_emb = all_emb.at[row].add(messages)
    return all_emb[: user_emb.shape[0]], all_emb[user_emb.shape[0]:]


if __name__ == "__main__":
    num_users = 50
    num_items = 190
    embedding_dim = 64
    n_layers = 2
    num_edges = 600
    N = num_users + num_items  # 240 -> padded to 256

    key = jax.random.PRNGKey(0)
    k_u, k_i, k_r, k_c = jax.random.split(key, 4)

    # nn.init.normal_(std=0.01) analogue, deterministic.
    user_emb = 0.01 * jax.random.normal(k_u, (num_users, embedding_dim), jnp.float32)
    item_emb = 0.01 * jax.random.normal(k_i, (num_items, embedding_dim), jnp.float32)

    # Random edge_index over the concatenated node set, shape (2, E), int32.
    row = jax.random.randint(k_r, (num_edges,), 0, N, dtype=jnp.int32)
    col = jax.random.randint(k_c, (num_edges,), 0, N, dtype=jnp.int32)
    edge_index = jnp.stack([row, col], axis=0)

    # Exact f32 gather/scatter reference.  Tolerances are loosened because
    # the adjacency and the contraction operand are bf16 (f32 accumulation).
    ref_u, ref_i = _reference_forward(user_emb, item_emb, edge_index, n_layers)

    # 1) Default big-tile path (tiles auto-clamped to the padded node count).
    user_final, item_final = lightgcn_forward(
        user_emb, item_emb, edge_index, n_layers=n_layers
    )
    jax.block_until_ready((user_final, item_final))
    assert user_final.shape == (num_users, embedding_dim)
    assert item_final.shape == (num_items, embedding_dim)
    assert jnp.allclose(user_final, ref_u, atol=2e-3, rtol=2e-2)
    assert jnp.allclose(item_final, ref_i, atol=2e-3, rtol=2e-2)

    # 2) Small-tile path: exercises the multi-tile (2x2) grid, the residual-
    #    folded output accumulator and the scalar-prefetched block-skip maps.
    u2, i2 = lightgcn_forward(
        user_emb, item_emb, edge_index, n_layers=n_layers, tile_n=128, tile_k=128
    )
    jax.block_until_ready((u2, i2))
    assert jnp.allclose(u2, ref_u, atol=2e-3, rtol=2e-2)
    assert jnp.allclose(i2, ref_i, atol=2e-3, rtol=2e-2)

    print("KERNEL_OK")
</pallas_src>

<mosaic_0001>
module attributes {stable_mosaic.version = 11 : i64} {
  func.func @_layer_kernel(%arg0: i32, %arg1: i32, %arg2: memref<1x1xi32, #tpu.memory_space<smem>>, %arg3: memref<1xi32, #tpu.memory_space<smem>>, %arg4: memref<64x256xf32, #tpu.memory_space<vmem>>, %arg5: memref<64x256xbf16, #tpu.memory_space<vmem>>, %arg6: memref<256x256xbf16, #tpu.memory_space<vmem>>, %arg7: memref<64x256xf32, #tpu.memory_space<vmem>>, %arg8: memref<64x256xbf16, #tpu.memory_space<vmem>>) attributes {dimension_semantics = [#tpu.dimension_semantics<parallel>, #tpu.dimension_semantics<arbitrary>], iteration_bounds = array<i64: 1, 1>, scalar_prefetch = 2 : i64, scratch_operands = 0 : i64, tpu.core_type = #tpu.core_type<tc>, window_params = [{transform_indices = @transform_0, window_bounds = array<i64: 64, 256>}, {transform_indices = @transform_1, window_bounds = array<i64: 64, 256>}, {transform_indices = @transform_2, window_bounds = array<i64: 256, 256>}, {transform_indices = @transform_3, window_bounds = array<i64: 64, 256>}, {transform_indices = @transform_4, window_bounds = array<i64: 64, 256>}]} {
    %c0_i32 = arith.constant 0 : i32
    %0 = arith.cmpi eq, %arg1, %c0_i32 : i32
    %1 = arith.extui %0 : i1 to i32
    %c0_i32_0 = arith.constant 0 : i32
    %2 = arith.cmpi ne, %1, %c0_i32_0 : i32
    scf.if %2 {
      %c0 = arith.constant 0 : index
      %c0_4 = arith.constant 0 : index
      %11 = vector.load %arg4[%c0, %c0_4] : memref<64x256xf32, #tpu.memory_space<vmem>>, vector<64x256xf32>
      %c0_5 = arith.constant 0 : index
      %c0_6 = arith.constant 0 : index
      %12 = vector.load %arg7[%c0_5, %c0_6] : memref<64x256xf32, #tpu.memory_space<vmem>>, vector<64x256xf32>
      tpu.vector_store %arg7[%c0_5, %c0_6], %11 {strides = array<i32>} : memref<64x256xf32, #tpu.memory_space<vmem>>, vector<64x256xf32>,
    } else {
    }
    %3 = arith.index_cast %arg0 : i32 to index
    %4 = memref.load %arg3[%3] : memref<1xi32, #tpu.memory_space<smem>>
    %5 = arith.cmpi slt, %arg1, %4 : i32
    %6 = arith.extui %5 : i1 to i32
    %c0_i32_1 = arith.constant 0 : i32
    %7 = arith.cmpi ne, %6, %c0_i32_1 : i32
    scf.if %7 {
      %c0 = arith.constant 0 : index
      %c0_4 = arith.constant 0 : index
      %11 = vector.load %arg7[%c0, %c0_4] : memref<64x256xf32, #tpu.memory_space<vmem>>, vector<64x256xf32>
      %c0_5 = arith.constant 0 : index
      %c0_6 = arith.constant 0 : index
      %12 = vector.load %arg5[%c0_5, %c0_6] : memref<64x256xbf16, #tpu.memory_space<vmem>>, vector<64x256xbf16>
      %c0_7 = arith.constant 0 : index
      %c0_8 = arith.constant 0 : index
      %13 = vector.load %arg6[%c0_7, %c0_8] : memref<256x256xbf16, #tpu.memory_space<vmem>>, vector<256x256xbf16>
      %cst = arith.constant dense<0.000000e+00> : vector<64x256xf32>
      %14 = tpu.matmul %12, %13, %cst {dimension_numbers = #tpu.dot_dimension_numbers<[1], [0], [0], [1], [0, 0, 1, 1], [], []>} : vector<64x256xbf16>, vector<256x256xbf16>, vector<64x256xf32> -> vector<64x256xf32>
      %15 = arith.addf %11, %14 : vector<64x256xf32>
      %c0_9 = arith.constant 0 : index
      %c0_10 = arith.constant 0 : index
      %16 = vector.load %arg7[%c0_9, %c0_10] : memref<64x256xf32, #tpu.memory_space<vmem>>, vector<64x256xf32>
      tpu.vector_store %arg7[%c0_9, %c0_10], %15 {strides = array<i32>} : memref<64x256xf32, #tpu.memory_space<vmem>>, vector<64x256xf32>,
    } else {
    }
    %c0_i32_2 = arith.constant 0 : i32
    %8 = arith.cmpi eq, %arg1, %c0_i32_2 : i32
    %9 = arith.extui %8 : i1 to i32
    %c0_i32_3 = arith.constant 0 : i32
    %10 = arith.cmpi ne, %9, %c0_i32_3 : i32
    scf.if %10 {
      %c0 = arith.constant 0 : index
      %c0_4 = arith.constant 0 : index
      %11 = vector.load %arg7[%c0, %c0_4] : memref<64x256xf32, #tpu.memory_space<vmem>>, vector<64x256xf32>
      %12 = arith.truncf %11 : vector<64x256xf32> to vector<64x256xbf16>
      %c0_5 = arith.constant 0 : index
      %c0_6 = arith.constant 0 : index
      %13 = vector.load %arg8[%c0_5, %c0_6] : memref<64x256xbf16, #tpu.memory_space<vmem>>, vector<64x256xbf16>
      tpu.vector_store %arg8[%c0_5, %c0_6], %12 {strides = array<i32>} : memref<64x256xbf16, #tpu.memory_space<vmem>>, vector<64x256xbf16>,
    } else {
    }
    return
  }
  func.func @transform_0(%arg0: i32, %arg1: i32, %arg2: memref<1x1xi32, #tpu.memory_space<smem>>, %arg3: memref<1xi32, #tpu.memory_space<smem>>) -> (i32, i32) {
    %c0_i32 = arith.constant 0 : i32
    %c0_i32_0 = arith.constant 0 : i32
    return %c0_i32, %arg0 : i32, i32
  }
  func.func @transform_1(%arg0: i32, %arg1: i32, %arg2: memref<1x1xi32, #tpu.memory_space<smem>>, %arg3: memref<1xi32, #tpu.memory_space<smem>>) -> (i32, i32) {
    %0 = arith.index_cast %arg0 : i32 to index
    %1 = arith.index_cast %arg1 : i32 to index
    %2 = memref.load %arg2[%0, %1] : memref<1x1xi32, #tpu.memory_space<smem>>
    %c0_i32 = arith.constant 0 : i32
    %c0_i32_0 = arith.constant 0 : i32
    return %c0_i32, %2 : i32, i32
  }
  func.func @transform_2(%arg0: i32, %arg1: i32, %arg2: memref<1x1xi32, #tpu.memory_space<smem>>, %arg3: memref<1xi32, #tpu.memory_space<smem>>) -> (i32, i32) {
    %0 = arith.index_cast %arg0 : i32 to index
    %1 = arith.index_cast %arg1 : i32 to index
    %2 = memref.load %arg2[%0, %1] : memref<1x1xi32, #tpu.memory_space<smem>>
    %c0_i32 = arith.constant 0 : i32
    return %2, %arg0 : i32, i32
  }
  func.func @transform_3(%arg0: i32, %arg1: i32, %arg2: memref<1x1xi32, #tpu.memory_space<smem>>, %arg3: memref<1xi32, #tpu.memory_space<smem>>) -> (i32, i32) {
    %c0_i32 = arith.constant 0 : i32
    %c0_i32_0 = arith.constant 0 : i32
    return %c0_i32, %arg0 : i32, i32
  }
  func.func @transform_4(%arg0: i32, %arg1: i32, %arg2: memref<1x1xi32, #tpu.memory_space<smem>>, %arg3: memref<1xi32, #tpu.memory_space<smem>>) -> (i32, i32) {
    %c0_i32 = arith.constant 0 : i32
    %c0_i32_0 = arith.constant 0 : i32
    return %c0_i32, %arg0 : i32, i32
  }
}

</mosaic_0001>

<llo_original>
// kernel: tpu_custom_call.1
$region0: #{tpu_custom_call.1}
  #allocation0 [shape = 'u32[]', space=smem, size = 0x4, offset = 0x4, fixed_abs, tag = 'smem constant byte address 0x4 - core index']
  #allocation1 [shape = 'u32[144,128]{1,0:T(1,128)}', space=vmem, size = 0x12000, scoped, tag = 'internal scratch']
  #allocation2 [shape = 's32[1]{0}', space=sflag, size = 0x4, scoped, tag = 'scoped memory for tpu_custom_call.1']
  #allocation3 [shape = 's32[1,1]{1,0:T(1,128)S(6)}', space=smem, size = 0x200, scoped, tag = 'prefetched SMEM operand 0']
  #allocation4 [shape = 's32[1]{0:T(128)S(6)}', space=smem, size = 0x200, scoped, tag = 'prefetched SMEM operand 1']
  %s0 = inlined_call_operand.<no memory space> [shape: s32[1,1], index: 0, kind: input, shape index: {}]
  %s1 = inlined_call_operand.<no memory space> [shape: s32[1], index: 1, kind: input, shape index: {}]
  %s2 = inlined_call_operand.hbm [shape: f32[64,256], index: 2, kind: input, shape index: {}]
  %s3 = inlined_call_operand.hbm [shape: bf16[64,256], index: 3, kind: input, shape index: {}]
  %s4 = inlined_call_operand.hbm [shape: bf16[256,256], index: 4, kind: input, shape index: {}]
  %s5 = inlined_call_operand.hbm [shape: f32[64,256], index: 5, kind: output, shape index: {0}]
  %s6 = inlined_call_operand.hbm [shape: bf16[64,256], index: 6, kind: output, shape index: {1}]
  %7 = xla_tuple %s5, %s6
  %s8 = sld [smem:[#allocation0]]
  $region54: #{tpu_custom_call.1} parent=0
    _
  %s10 = ssub.s32 1, %s8
  %s11 = scalar_select 0, %s10, %s8
  %12 = sst [smem:[#allocation3]] %s0
  %13 = sst [smem:[#allocation4]] %s1
  $region1: #{tpu_custom_call.1} parent=0
    #allocation5 [shape = 'u8[65536]{0}', space=vmem, size = 0x10000, scoped, tag = 'input window, operand 2, single buffered']
    #allocation6 [shape = 's32[1]{0}', space=sflag, size = 0x4, scoped, tag = 'scoped memory for tpu_custom_call.1']
    #allocation7 [shape = 's32[1]{0}', space=sflag, size = 0x4, scoped, tag = 'scoped memory for tpu_custom_call.1']
    #allocation8 [shape = 'u8[32768]{0}', space=vmem, size = 0x8000, scoped, tag = 'input window, operand 3, single buffered']
    #allocation9 [shape = 's32[1]{0}', space=sflag, size = 0x4, scoped, tag = 'scoped memory for tpu_custom_call.1']
    #allocation10 [shape = 'u8[131072]{0}', space=vmem, size = 0x20000, scoped, tag = 'input window, operand 4, single buffered']
    #allocation11 [shape = 'u8[65536]{0}', space=vmem, size = 0x10000, scoped, tag = 'output window, operand 0, single buffered']
    #allocation12 [shape = 'u8[32768]{0}', space=vmem, size = 0x8000, scoped, tag = 'output window, operand 1, single buffered']
    #allocation13 [shape = 's32[1]{0}', space=sflag, size = 0x4, scoped, tag = 'scoped memory for tpu_custom_call.1']
    %14 = vsyncpa [#allocation6], 0
    %15 = vsyncpa [#allocation9], 0
    %16 = vsyncpa [#allocation7], 0
    %17 = vsyncpa [#allocation13], 0
    // Predicated region
    $region2: #{tpu_custom_call.1} parent=1 // pred_check
      _
    $region3: #{tpu_custom_call.1} parent=1 // pred_check_branch
      %19 = sbr.rel (0) target = $region5
    $region4: #{tpu_custom_call.1} parent=1 // pred_region
      %s21 = ssub.s32 2048, 2048
      %22 = vsyncadd [#allocation6], %s21
      %s23 = sshll.u32 [#allocation5], 4
      %s24 = int_to_ptr.vmem [resolvable:$true] %s23
      %29 = dma.hbm_to_vmem [thread:$0]  %s2, 2048, %s24, [#allocation6], 256, 256, 16
    $region5: #{tpu_custom_call.1} parent=1 // pred_fallthru
      _
    // Predicated region
    $region6: #{tpu_custom_call.1} parent=1 // pred_check
      _
    $region7: #{tpu_custom_call.1} parent=1 // pred_check_branch
      %31 = sbr.rel (0) target = $region9
    $region8: #{tpu_custom_call.1} parent=1 // pred_region
      %s32 = sadd.s32 0, 0
      %s33 = smul.u32 %s32, 128
      %s34 = sadd.s32 %s33, 0
      %s35 = sld [smem:[#allocation3 + %s34]]
      %s36 = smul.u32 2, %s35
      %s38 = ssub.s32 1024, 1024
      %39 = vsyncadd [#allocation9], %s38
      %s40 = smul.addr %s36, 64
      %s41 = scalar_lea.hbm %s3, %s40
      %s42 = sshll.u32 [#allocation8], 4
      %s43 = int_to_ptr.vmem [resolvable:$true] %s42
      %48 = dma.hbm_to_vmem [thread:$0]  %s41, 1024, %s43, [#allocation9], 128, 128, 8
    $region9: #{tpu_custom_call.1} parent=1 // pred_fallthru
      _
    // Predicated region
    $region10: #{tpu_custom_call.1} parent=1 // pred_check
      _
    $region11: #{tpu_custom_call.1} parent=1 // pred_check_branch
      %50 = sbr.rel (0) target = $region13
    $region12: #{tpu_custom_call.1} parent=1 // pred_region
      %s51 = sadd.s32 0, 0
      %s52 = smul.u32 %s51, 128
      %s53 = sadd.s32 %s52, 0
      %s54 = sld [smem:[#allocation3 + %s53]]
      %s55 = smul.u32 32, %s54
      %s57 = ssub.s32 4096, 4096
      %58 = vsyncadd [#allocation9], %s57
      %s59 = smul.addr %s55, 2
      %s60 = smul.addr %s59, 64
      %s61 = scalar_lea.hbm %s4, %s60
      %s62 = sshll.u32 [#allocation10], 4
      %s63 = int_to_ptr.vmem [resolvable:$true] %s62
      %68 = dma.hbm_to_vmem [thread:$0]  %s61, 4096, %s63, [#allocation9], 128, 128, 8
    $region13: #{tpu_custom_call.1} parent=1 // pred_fallthru
      _
    // Predicated region
    $region14: #{tpu_custom_call.1} parent=1 // pred_check
      _
    $region15: #{tpu_custom_call.1} parent=1 // pred_check_branch
      %70 = sbr.rel (0) target = $region17
    $region16: #{tpu_custom_call.1} parent=1 // pred_region
      %71 = dma.done [#allocation6], 2048
    $region17: #{tpu_custom_call.1} parent=1 // pred_fallthru
      _
    // Predicated region
    $region18: #{tpu_custom_call.1} parent=1 // pred_check
      _
    $region19: #{tpu_custom_call.1} parent=1 // pred_check_branch
      %73 = sbr.rel (0) target = $region21
    $region20: #{tpu_custom_call.1} parent=1 // pred_region
      %74 = dma.done [#allocation9], 1024
    $region21: #{tpu_custom_call.1} parent=1 // pred_fallthru
      _
    // Predicated region
    $region22: #{tpu_custom_call.1} parent=1 // pred_check
      _
    $region23: #{tpu_custom_call.1} parent=1 // pred_check_branch
      %76 = sbr.rel (0) target = $region25
    $region24: #{tpu_custom_call.1} parent=1 // pred_region
      %77 = dma.done [#allocation9], 4096
    $region25: #{tpu_custom_call.1} parent=1 // pred_fallthru
      _
    %s78 = sadd.s32 0, 0
    %s79 = smul.u32 %s78, 128
    %s80 = sadd.s32 %s79, 0
    %s81 = sld [smem:[#allocation3 + %s80]]
    %s82 = smul.u32 2, %s81
    %s83 = sadd.s32 0, 0
    %s84 = smul.u32 %s83, 128
    %s85 = sadd.s32 %s84, 0
    %s86 = sld [smem:[#allocation3 + %s85]]
    %s87 = smul.u32 32, %s86
    %p88 = scmp.eq.s32.totalorder 0, 0
    // Predicated region
    $region26: #{tpu_custom_call.1} parent=1 // pred_check
      %p89 = pneg %p88
    $region27: #{tpu_custom_call.1} parent=1 // pred_check_branch
      %91 = sbr.rel (%p89) target = $region29
    $region28: #{tpu_custom_call.1} parent=1 // pred_region
      %v92 = vld [vmem:[#allocation5] sm:$0xff]
      %v93 = vld [vmem:[#allocation5 + $0x8] sm:$0xff]
      %v94 = vld [vmem:[#allocation5 + $0x10] sm:$0xff]
      %v95 = vld [vmem:[#allocation5 + $0x18] sm:$0xff]
      %v96 = vld [vmem:[#allocation5 + $0x20] sm:$0xff]
      %v97 = vld [vmem:[#allocation5 + $0x28] sm:$0xff]
      %v98 = vld [vmem:[#allocation5 + $0x30] sm:$0xff]
      %v99 = vld [vmem:[#allocation5 + $0x38] sm:$0xff]
      %v100 = vld [vmem:[#allocation5 + $0x40] sm:$0xff]
      %v101 = vld [vmem:[#allocation5 + $0x48] sm:$0xff]
      %v102 = vld [vmem:[#allocation5 + $0x50] sm:$0xff]
      %v103 = vld [vmem:[#allocation5 + $0x58] sm:$0xff]
      %v104 = vld [vmem:[#allocation5 + $0x60] sm:$0xff]
      %v105 = vld [vmem:[#allocation5 + $0x68] sm:$0xff]
      %v106 = vld [vmem:[#allocation5 + $0x70] sm:$0xff]
      %v107 = vld [vmem:[#allocation5 + $0x78] sm:$0xff]
      %108 = vst [vmem:[#allocation11] sm:$0xff] %v92
      %109 = vst [vmem:[#allocation11 + $0x8] sm:$0xff] %v93
      %110 = vst [vmem:[#allocation11 + $0x10] sm:$0xff] %v94
      %111 = vst [vmem:[#allocation11 + $0x18] sm:$0xff] %v95
      %112 = vst [vmem:[#allocation11 + $0x20] sm:$0xff] %v96
      %113 = vst [vmem:[#allocation11 + $0x28] sm:$0xff] %v97
      %114 = vst [vmem:[#allocation11 + $0x30] sm:$0xff] %v98
      %115 = vst [vmem:[#allocation11 + $0x38] sm:$0xff] %v99
      %116 = vst [vmem:[#allocation11 + $0x40] sm:$0xff] %v100
      %117 = vst [vmem:[#allocation11 + $0x48] sm:$0xff] %v101
      %118 = vst [vmem:[#allocation11 + $0x50] sm:$0xff] %v102
      %119 = vst [vmem:[#allocation11 + $0x58] sm:$0xff] %v103
      %120 = vst [vmem:[#allocation11 + $0x60] sm:$0xff] %v104
      %121 = vst [vmem:[#allocation11 + $0x68] sm:$0xff] %v105
      %122 = vst [vmem:[#allocation11 + $0x70] sm:$0xff] %v106
      %123 = vst [vmem:[#allocation11 + $0x78] sm:$0xff] %v107
    $region29: #{tpu_custom_call.1} parent=1 // pred_fallthru
      _
    %s124 = sld [smem:[#allocation4]]
    %p125 = scmp.lt.s32.totalorder 0, %s124
    // Predicated region
    $region30: #{tpu_custom_call.1} parent=1 // pred_check
      %p126 = pneg %p125
    $region31: #{tpu_custom_call.1} parent=1 // pred_check_branch
      %128 = sbr.rel (%p126) target = $region33
    $region32: #{tpu_custom_call.1} parent=1 // pred_region
      %v129 = vld [vmem:[#allocation11] sm:$0xff]
      %v130 = vld [vmem:[#allocation11 + $0x8] sm:$0xff]
      %v131 = vld [vmem:[#allocation11 + $0x10] sm:$0xff]
      %v132 = vld [vmem:[#allocation11 + $0x18] sm:$0xff]
      %v133 = vld [vmem:[#allocation11 + $0x20] sm:$0xff]
      %v134 = vld [vmem:[#allocation11 + $0x28] sm:$0xff]
      %v135 = vld [vmem:[#allocation11 + $0x30] sm:$0xff]
      %v136 = vld [vmem:[#allocation11 + $0x38] sm:$0xff]
      %v137 = vld [vmem:[#allocation11 + $0x40] sm:$0xff]
      %v138 = vld [vmem:[#allocation11 + $0x48] sm:$0xff]
      %v139 = vld [vmem:[#allocation11 + $0x50] sm:$0xff]
      %v140 = vld [vmem:[#allocation11 + $0x58] sm:$0xff]
      %v141 = vld [vmem:[#allocation11 + $0x60] sm:$0xff]
      %v142 = vld [vmem:[#allocation11 + $0x68] sm:$0xff]
      %v143 = vld [vmem:[#allocation11 + $0x70] sm:$0xff]
      %v144 = vld [vmem:[#allocation11 + $0x78] sm:$0xff]
      %v145 = vld [vmem:[#allocation8] sm:$0xff]
      %v146 = vld [vmem:[#allocation8 + $0x8] sm:$0xff]
      %v147 = vld [vmem:[#allocation8 + $0x10] sm:$0xff]
      %v148 = vld [vmem:[#allocation8 + $0x18] sm:$0xff]
      %v149 = vld [vmem:[#allocation8 + $0x20] sm:$0xff]
      %v150 = vld [vmem:[#allocation8 + $0x28] sm:$0xff]
      %v151 = vld [vmem:[#allocation8 + $0x30] sm:$0xff]
      %v152 = vld [vmem:[#allocation8 + $0x38] sm:$0xff]
      %v153 = vld [vmem:[#allocation10] sm:$0xff]
      %v154 = vld [vmem:[#allocation10 + $0x8] sm:$0xff]
      %v155 = vld [vmem:[#allocation10 + $0x10] sm:$0xff]
      %v156 = vld [vmem:[#allocation10 + $0x18] sm:$0xff]
      %v157 = vld [vmem:[#allocation10 + $0x20] sm:$0xff]
      %v158 = vld [vmem:[#allocation10 + $0x28] sm:$0xff]
      %v159 = vld [vmem:[#allocation10 + $0x30] sm:$0xff]
      %v160 = vld [vmem:[#allocation10 + $0x38] sm:$0xff]
      %v161 = vld [vmem:[#allocation10 + $0x40] sm:$0xff]
      %v162 = vld [vmem:[#allocation10 + $0x48] sm:$0xff]
      %v163 = vld [vmem:[#allocation10 + $0x50] sm:$0xff]
      %v164 = vld [vmem:[#allocation10 + $0x58] sm:$0xff]
      %v165 = vld [vmem:[#allocation10 + $0x60] sm:$0xff]
      %v166 = vld [vmem:[#allocation10 + $0x68] sm:$0xff]
      %v167 = vld [vmem:[#allocation10 + $0x70] sm:$0xff]
      %v168 = vld [vmem:[#allocation10 + $0x78] sm:$0xff]
      %v169 = vld [vmem:[#allocation10 + $0x80] sm:$0xff]
      %v170 = vld [vmem:[#allocation10 + $0x88] sm:$0xff]
      %v171 = vld [vmem:[#allocation10 + $0x90] sm:$0xff]
      %v172 = vld [vmem:[#allocation10 + $0x98] sm:$0xff]
      %v173 = vld [vmem:[#allocation10 + $0xa0] sm:$0xff]
      %v174 = vld [vmem:[#allocation10 + $0xa8] sm:$0xff]
      %v175 = vld [vmem:[#allocation10 + $0xb0] sm:$0xff]
      %v176 = vld [vmem:[#allocation10 + $0xb8] sm:$0xff]
      %v177 = vld [vmem:[#allocation10 + $0xc0] sm:$0xff]
      %v178 = vld [vmem:[#allocation10 + $0xc8] sm:$0xff]
      %v179 = vld [vmem:[#allocation10 + $0xd0] sm:$0xff]
      %v180 = vld [vmem:[#allocation10 + $0xd8] sm:$0xff]
      %v181 = vld [vmem:[#allocation10 + $0xe0] sm:$0xff]
      %v182 = vld [vmem:[#allocation10 + $0xe8] sm:$0xff]
      %v183 = vld [vmem:[#allocation10 + $0xf0] sm:$0xff]
      %v184 = vld [vmem:[#allocation10 + $0xf8] sm:$0xff]
      %v193 = vunpack.c.l.b16 %v145
      %v194 = vunpack.c.h.b16 %v145
      %v195 = vunpack.c.l.b16 %v146
      %v196 = vunpack.c.h.b16 %v146
      %v197 = vunpack.c.l.b16 %v147
      %v198 = vunpack.c.h.b16 %v147
      %v199 = vunpack.c.l.b16 %v148
      %v200 = vunpack.c.h.b16 %v148
      %v201 = vunpack.c.l.b16 %v149
      %v202 = vunpack.c.h.b16 %v149
      %v203 = vunpack.c.l.b16 %v150
      %v204 = vunpack.c.h.b16 %v150
      %v205 = vunpack.c.l.b16 %v151
      %v206 = vunpack.c.h.b16 %v151
      %v207 = vunpack.c.l.b16 %v152
      %v208 = vunpack.c.h.b16 %v152
      %v209 = vpack.c.b16 %v195, %v193
      %v210 = vpack.c.b16 %v196, %v194
      %v211 = vpack.c.b16 %v199, %v197
      %v212 = vpack.c.b16 %v200, %v198
      %v213 = vpack.c.b16 %v203, %v201
      %v214 = vpack.c.b16 %v204, %v202
      %v215 = vpack.c.b16 %v207, %v205
      %v216 = vpack.c.b16 %v208, %v206
      %v257 = vunpack.c.l.b16 %v153
      %v258 = vunpack.c.h.b16 %v153
      %v259 = vunpack.c.l.b16 %v154
      %v260 = vunpack.c.h.b16 %v154
      %v261 = vunpack.c.l.b16 %v155
      %v262 = vunpack.c.h.b16 %v155
      %v263 = vunpack.c.l.b16 %v156
      %v264 = vunpack.c.h.b16 %v156
      %v265 = vunpack.c.l.b16 %v157
      %v266 = vunpack.c.h.b16 %v157
      %v267 = vunpack.c.l.b16 %v158
      %v268 = vunpack.c.h.b16 %v158
      %v269 = vunpack.c.l.b16 %v159
      %v270 = vunpack.c.h.b16 %v159
      %v271 = vunpack.c.l.b16 %v160
      %v272 = vunpack.c.h.b16 %v160
      %v273 = vunpack.c.l.b16 %v161
      %v274 = vunpack.c.h.b16 %v161
      %v275 = vunpack.c.l.b16 %v162
      %v276 = vunpack.c.h.b16 %v162
      %v277 = vunpack.c.l.b16 %v163
      %v278 = vunpack.c.h.b16 %v163
      %v279 = vunpack.c.l.b16 %v164
      %v280 = vunpack.c.h.b16 %v164
      %v281 = vunpack.c.l.b16 %v165
      %v282 = vunpack.c.h.b16 %v165
      %v283 = vunpack.c.l.b16 %v166
      %v284 = vunpack.c.h.b16 %v166
      %v285 = vunpack.c.l.b16 %v167
      %v286 = vunpack.c.h.b16 %v167
      %v287 = vunpack.c.l.b16 %v168
      %v288 = vunpack.c.h.b16 %v168
      %v289 = vunpack.c.l.b16 %v169
      %v290 = vunpack.c.h.b16 %v169
      %v291 = vunpack.c.l.b16 %v170
      %v292 = vunpack.c.h.b16 %v170
      %v293 = vunpack.c.l.b16 %v171
      %v294 = vunpack.c.h.b16 %v171
      %v295 = vunpack.c.l.b16 %v172
      %v296 = vunpack.c.h.b16 %v172
      %v297 = vunpack.c.l.b16 %v173
      %v298 = vunpack.c.h.b16 %v173
      %v299 = vunpack.c.l.b16 %v174
      %v300 = vunpack.c.h.b16 %v174
      %v301 = vunpack.c.l.b16 %v175
      %v302 = vunpack.c.h.b16 %v175
      %v303 = vunpack.c.l.b16 %v176
      %v304 = vunpack.c.h.b16 %v176
      %v305 = vunpack.c.l.b16 %v177
      %v306 = vunpack.c.h.b16 %v177
      %v307 = vunpack.c.l.b16 %v178
      %v308 = vunpack.c.h.b16 %v178
      %v309 = vunpack.c.l.b16 %v179
      %v310 = vunpack.c.h.b16 %v179
      %v311 = vunpack.c.l.b16 %v180
      %v312 = vunpack.c.h.b16 %v180
      %v313 = vunpack.c.l.b16 %v181
      %v314 = vunpack.c.h.b16 %v181
      %v315 = vunpack.c.l.b16 %v182
      %v316 = vunpack.c.h.b16 %v182
      %v317 = vunpack.c.l.b16 %v183
      %v318 = vunpack.c.h.b16 %v183
      %v319 = vunpack.c.l.b16 %v184
      %v320 = vunpack.c.h.b16 %v184
      %v321 = vpack.c.b16 %v259, %v257
      %v322 = vpack.c.b16 %v260, %v258
      %v323 = vpack.c.b16 %v263, %v261
      %v324 = vpack.c.b16 %v264, %v262
      %v325 = vpack.c.b16 %v267, %v265
      %v326 = vpack.c.b16 %v268, %v266
      %v327 = vpack.c.b16 %v271, %v269
      %v328 = vpack.c.b16 %v272, %v270
      %v329 = vpack.c.b16 %v275, %v273
      %v330 = vpack.c.b16 %v276, %v274
      %v331 = vpack.c.b16 %v279, %v277
      %v332 = vpack.c.b16 %v280, %v278
      %v333 = vpack.c.b16 %v283, %v281
      %v334 = vpack.c.b16 %v284, %v282
      %v335 = vpack.c.b16 %v287, %v285
      %v336 = vpack.c.b16 %v288, %v286
      %v337 = vpack.c.b16 %v291, %v289
      %v338 = vpack.c.b16 %v292, %v290
      %v339 = vpack.c.b16 %v295, %v293
      %v340 = vpack.c.b16 %v296, %v294
      %v341 = vpack.c.b16 %v299, %v297
      %v342 = vpack.c.b16 %v300, %v298
      %v343 = vpack.c.b16 %v303, %v301
      %v344 = vpack.c.b16 %v304, %v302
      %v345 = vpack.c.b16 %v307, %v305
      %v346 = vpack.c.b16 %v308, %v306
      %v347 = vpack.c.b16 %v311, %v309
      %v348 = vpack.c.b16 %v312, %v310
      %v349 = vpack.c.b16 %v315, %v313
      %v350 = vpack.c.b16 %v316, %v314
      %v351 = vpack.c.b16 %v319, %v317
      %v352 = vpack.c.b16 %v320, %v318
      %385 = vmatprep.subr.bf16.mxu0 %v322
      %386 = vmatpush1.bf16.msra.mxu0 %v321
      %387 = vmatprep.subr.bf16.mxu0 %v324
      %388 = vmatpush1.bf16.msra.mxu0 %v323
      %389 = vmatprep.subr.bf16.mxu0 %v326
      %390 = vmatpush1.bf16.msra.mxu0 %v325
      %391 = vmatprep.subr.bf16.mxu0 %v328
      %392 = vmatpush1.bf16.msra.mxu0 %v327
      %393 = vmatprep.subr.bf16.mxu0 %v330
      %394 = vmatpush1.bf16.msra.mxu0 %v329
      %395 = vmatprep.subr.bf16.mxu0 %v332
      %396 = vmatpush1.bf16.msra.mxu0 %v331
      %397 = vmatprep.subr.bf16.mxu0 %v334
      %398 = vmatpush1.bf16.msra.mxu0 %v333
      %399 = vmatprep.subr.bf16.mxu0 %v336
      %400 = vmatpush1.bf16.msra.mxu0 %v335
      %401 = vmatprep.subr.bf16.mxu0 %v338
      %402 = vmatpush1.bf16.msra.mxu0 %v337
      %403 = vmatprep.subr.bf16.mxu0 %v340
      %404 = vmatpush1.bf16.msra.mxu0 %v339
      %405 = vmatprep.subr.bf16.mxu0 %v342
      %406 = vmatpush1.bf16.msra.mxu0 %v341
      %407 = vmatprep.subr.bf16.mxu0 %v344
      %408 = vmatpush1.bf16.msra.mxu0 %v343
      %409 = vmatprep.subr.bf16.mxu0 %v346
      %410 = vmatpush1.bf16.msra.mxu0 %v345
      %411 = vmatprep.subr.bf16.mxu0 %v348
      %412 = vmatpush1.bf16.msra.mxu0 %v347
      %413 = vmatprep.subr.bf16.mxu0 %v350
      %414 = vmatpush1.bf16.msra.mxu0 %v349
      %415 = vmatprep.subr.bf16.mxu0 %v352
      %416 = vmatpush1.bf16.msra.mxu0 %v351
      %417 = vmatprep.mubr.bf16.mxu0 %v210
      %418 = vmatmul.mubr.bf16.gmra.mrb[0].mxu0 %v209
      %v419 = vpop.f32.mrb[0].mxu0
      %v420 = vadd.f32 0.0, %v419
      %v421 = vpop.f32.mrb[0].mxu0
      %v422 = vadd.f32 0.0, %v421
      %v423 = vpop.f32.mrb[0].mxu0
      %v424 = vadd.f32 0.0, %v423
      %v425 = vpop.f32.mrb[0].mxu0
      %v426 = vadd.f32 0.0, %v425
      %427 = vmatprep.mubr.bf16.mxu0 %v212
      %428 = vmatmul.mubr.bf16.gmra.mrb[0].mxu0 %v211
      %v429 = vpop.f32.mrb[0].mxu0
      %v430 = vadd.f32 0.0, %v429
      %v431 = vpop.f32.mrb[0].mxu0
      %v432 = vadd.f32 0.0, %v431
      %v433 = vpop.f32.mrb[0].mxu0
      %v434 = vadd.f32 0.0, %v433
      %v435 = vpop.f32.mrb[0].mxu0
      %v436 = vadd.f32 0.0, %v435
      %437 = vmatprep.mubr.bf16.mxu0 %v214
      %438 = vmatmul.mubr.bf16.gmra.mrb[0].mxu0 %v213
      %v439 = vpop.f32.mrb[0].mxu0
      %v440 = vadd.f32 0.0, %v439
      %v441 = vpop.f32.mrb[0].mxu0
      %v442 = vadd.f32 0.0, %v441
      %v443 = vpop.f32.mrb[0].mxu0
      %v444 = vadd.f32 0.0, %v443
      %v445 = vpop.f32.mrb[0].mxu0
      %v446 = vadd.f32 0.0, %v445
      %447 = vmatprep.mubr.bf16.mxu0 %v216
      %448 = vmatmul.mubr.bf16.gmra.mrb[0].mxu0 %v215
      %v449 = vpop.f32.mrb[0].mxu0
      %v450 = vadd.f32 0.0, %v449
      %v451 = vpop.f32.mrb[0].mxu0
      %v452 = vadd.f32 0.0, %v451
      %v453 = vpop.f32.mrb[0].mxu0
      %v454 = vadd.f32 0.0, %v453
      %v455 = vpop.f32.mrb[0].mxu0
      %v456 = vadd.f32 0.0, %v455
      %457 = vdwg.mxu0
      %v458 = vadd.f32 %v129, %v420
      %v459 = vadd.f32 %v130, %v422
      %v460 = vadd.f32 %v131, %v424
      %v461 = vadd.f32 %v132, %v426
      %v462 = vadd.f32 %v133, %v430
      %v463 = vadd.f32 %v134, %v432
      %v464 = vadd.f32 %v135, %v434
      %v465 = vadd.f32 %v136, %v436
      %v466 = vadd.f32 %v137, %v440
      %v467 = vadd.f32 %v138, %v442
      %v468 = vadd.f32 %v139, %v444
      %v469 = vadd.f32 %v140, %v446
      %v470 = vadd.f32 %v141, %v450
      %v471 = vadd.f32 %v142, %v452
      %v472 = vadd.f32 %v143, %v454
      %v473 = vadd.f32 %v144, %v456
      %474 = vst [vmem:[#allocation11] sm:$0xff] %v458
      %475 = vst [vmem:[#allocation11 + $0x8] sm:$0xff] %v459
      %476 = vst [vmem:[#allocation11 + $0x10] sm:$0xff] %v460
      %477 = vst [vmem:[#allocation11 + $0x18] sm:$0xff] %v461
      %478 = vst [vmem:[#allocation11 + $0x20] sm:$0xff] %v462
      %479 = vst [vmem:[#allocation11 + $0x28] sm:$0xff] %v463
      %480 = vst [vmem:[#allocation11 + $0x30] sm:$0xff] %v464
      %481 = vst [vmem:[#allocation11 + $0x38] sm:$0xff] %v465
      %482 = vst [vmem:[#allocation11 + $0x40] sm:$0xff] %v466
      %483 = vst [vmem:[#allocation11 + $0x48] sm:$0xff] %v467
      %484 = vst [vmem:[#allocation11 + $0x50] sm:$0xff] %v468
      %485 = vst [vmem:[#allocation11 + $0x58] sm:$0xff] %v469
      %486 = vst [vmem:[#allocation11 + $0x60] sm:$0xff] %v470
      %487 = vst [vmem:[#allocation11 + $0x68] sm:$0xff] %v471
      %488 = vst [vmem:[#allocation11 + $0x70] sm:$0xff] %v472
      %489 = vst [vmem:[#allocation11 + $0x78] sm:$0xff] %v473
    $region33: #{tpu_custom_call.1} parent=1 // pred_fallthru
      _
    // Predicated region
    $region34: #{tpu_custom_call.1} parent=1 // pred_check
      %p490 = pneg %p88
    $region35: #{tpu_custom_call.1} parent=1 // pred_check_branch
      %492 = sbr.rel (%p490) target = $region37
    $region36: #{tpu_custom_call.1} parent=1 // pred_region
      %v493 = vld [vmem:[#allocation11] sm:$0xff]
      %v494 = vld [vmem:[#allocation11 + $0x8] sm:$0xff]
      %v495 = vld [vmem:[#allocation11 + $0x10] sm:$0xff]
      %v496 = vld [vmem:[#allocation11 + $0x18] sm:$0xff]
      %v497 = vld [vmem:[#allocation11 + $0x20] sm:$0xff]
      %v498 = vld [vmem:[#allocation11 + $0x28] sm:$0xff]
      %v499 = vld [vmem:[#allocation11 + $0x30] sm:$0xff]
      %v500 = vld [vmem:[#allocation11 + $0x38] sm:$0xff]
      %v501 = vld [vmem:[#allocation11 + $0x40] sm:$0xff]
      %v502 = vld [vmem:[#allocation11 + $0x48] sm:$0xff]
      %v503 = vld [vmem:[#allocation11 + $0x50] sm:$0xff]
      %v504 = vld [vmem:[#allocation11 + $0x58] sm:$0xff]
      %v505 = vld [vmem:[#allocation11 + $0x60] sm:$0xff]
      %v506 = vld [vmem:[#allocation11 + $0x68] sm:$0xff]
      %v507 = vld [vmem:[#allocation11 + $0x70] sm:$0xff]
      %v508 = vld [vmem:[#allocation11 + $0x78] sm:$0xff]
      %v509 = vpack.c.bf16 %v495, %v493
      %v510 = vpack.c.bf16 %v496, %v494
      %v511 = vpack.c.bf16 %v499, %v497
      %v512 = vpack.c.bf16 %v500, %v498
      %v513 = vpack.c.bf16 %v503, %v501
      %v514 = vpack.c.bf16 %v504, %v502
      %v515 = vpack.c.bf16 %v507, %v505
      %v516 = vpack.c.bf16 %v508, %v506
      %v525 = vunpack.c.l.b16 %v509
      %v526 = vunpack.c.l.b16 %v510
      %v527 = vunpack.c.h.b16 %v509
      %v528 = vunpack.c.h.b16 %v510
      %v529 = vunpack.c.l.b16 %v511
      %v530 = vunpack.c.l.b16 %v512
      %v531 = vunpack.c.h.b16 %v511
      %v532 = vunpack.c.h.b16 %v512
      %v533 = vunpack.c.l.b16 %v513
      %v534 = vunpack.c.l.b16 %v514
      %v535 = vunpack.c.h.b16 %v513
      %v536 = vunpack.c.h.b16 %v514
      %v537 = vunpack.c.l.b16 %v515
      %v538 = vunpack.c.l.b16 %v516
      %v539 = vunpack.c.h.b16 %v515
      %v540 = vunpack.c.h.b16 %v516
      %v541 = vpack.c.b16 %v526, %v525
      %v542 = vpack.c.b16 %v528, %v527
      %v543 = vpack.c.b16 %v530, %v529
      %v544 = vpack.c.b16 %v532, %v531
      %v545 = vpack.c.b16 %v534, %v533
      %v546 = vpack.c.b16 %v536, %v535
      %v547 = vpack.c.b16 %v538, %v537
      %v548 = vpack.c.b16 %v540, %v539
      %557 = vst [vmem:[#allocation12] sm:$0xff] %v541
      %558 = vst [vmem:[#allocation12 + $0x8] sm:$0xff] %v542
      %559 = vst [vmem:[#allocation12 + $0x10] sm:$0xff] %v543
      %560 = vst [vmem:[#allocation12 + $0x18] sm:$0xff] %v544
      %561 = vst [vmem:[#allocation12 + $0x20] sm:$0xff] %v545
      %562 = vst [vmem:[#allocation12 + $0x28] sm:$0xff] %v546
      %563 = vst [vmem:[#allocation12 + $0x30] sm:$0xff] %v547
      %564 = vst [vmem:[#allocation12 + $0x38] sm:$0xff] %v548
    $region37: #{tpu_custom_call.1} parent=1 // pred_fallthru
      _
    // Predicated region
    $region38: #{tpu_custom_call.1} parent=1 // pred_check
      _
    $region39: #{tpu_custom_call.1} parent=1 // pred_check_branch
      %566 = sbr.rel (0) target = $region41
    $region40: #{tpu_custom_call.1} parent=1 // pred_region
      %s568 = ssub.s32 2048, 2048
      %569 = vsyncadd [#allocation7], %s568
      %s570 = sshll.u32 [#allocation11], 4
      %s571 = int_to_ptr.vmem [resolvable:$true] %s570
      %576 = dma.vmem_to_hbm [thread:$0]  %s571, 2048, %s5, [#allocation7], 256, 256, 16
    $region41: #{tpu_custom_call.1} parent=1 // pred_fallthru
      _
    // Predicated region
    $region42: #{tpu_custom_call.1} parent=1 // pred_check
      _
    $region43: #{tpu_custom_call.1} parent=1 // pred_check_branch
      %578 = sbr.rel (0) target = $region45
    $region44: #{tpu_custom_call.1} parent=1 // pred_region
      %s580 = ssub.s32 1024, 1024
      %581 = vsyncadd [#allocation13], %s580
      %s582 = sshll.u32 [#allocation12], 4
      %s583 = int_to_ptr.vmem [resolvable:$true] %s582
      %588 = dma.vmem_to_hbm [thread:$0]  %s583, 1024, %s6, [#allocation13], 128, 128, 8
    $region45: #{tpu_custom_call.1} parent=1 // pred_fallthru
      _
    // Predicated region
    $region46: #{tpu_custom_call.1} parent=1 // pred_check
      _
    $region47: #{tpu_custom_call.1} parent=1 // pred_check_branch
      %590 = sbr.rel (0) target = $region49
    $region48: #{tpu_custom_call.1} parent=1 // pred_region
      %591 = dma.done [#allocation7], 2048
    $region49: #{tpu_custom_call.1} parent=1 // pred_fallthru
      _
    // Predicated region
    $region50: #{tpu_custom_call.1} parent=1 // pred_check
      _
    $region51: #{tpu_custom_call.1} parent=1 // pred_check_branch
      %593 = sbr.rel (0) target = $region53
    $region52: #{tpu_custom_call.1} parent=1 // pred_region
      %594 = dma.done [#allocation13], 1024
    $region53: #{tpu_custom_call.1} parent=1 // pred_fallthru
      _
    %595 = vsyncpa [#allocation6], 1
    %596 = vsyncpa [#allocation9], 1
    %597 = vsyncpa [#allocation7], 1
    %598 = vsyncpa [#allocation13], 1

</llo_original>
